<compile_context>
chip_gen: v6e
topology: v6e:2x2x1
jax: 0.10.0
libtpu: 0.0.40
codegen_flags: <defaults>
</compile_context>

<pallas_src>
import functools

import jax
import jax.numpy as jnp
from jax import lax
from jax.experimental import pallas as pl
from jax.experimental.pallas import tpu as pltpu


def _round_up(x, m):
    return ((x + m - 1) // m) * m


def _pick_tile_m(m_padded):
    # Large tiles amortize the ~0.35us per-grid-step overhead (this kernel is
    # step-overhead / bandwidth bound, not compute bound).  Prefer the largest
    # tile that still leaves >=2 grid steps so the "parallel" M axis can shard
    # across v7x's two TensorCores; fall back to a single tile for tiny M.
    candidates = (8192, 4096, 2048, 1024, 512, 256, 128)
    for t in candidates:
        if m_padded % t == 0 and m_padded // t >= 2:
            return t
    for t in candidates:
        if m_padded % t == 0:
            return t
    return m_padded


# ---------------------------------------------------------------------------
# Fused kernel: dual init conv (single matmul, on-chip transpose of z) + bias
#               + clamp + OP override + dx_dt rows, one lane-dense output slab.
# ---------------------------------------------------------------------------
def _fused_init_kernel(z_ref, w_ref, b_ref, aux_ref, out_ref, *, out_dim):
    d = out_dim
    # z tile is (TM, H) in natural layout; contract H with H so the transpose
    # happens on the MXU path (no wrapper-side HBM transpose of z).
    raw = lax.dot_general(
        w_ref[...], z_ref[...],
        dimension_numbers=(((1,), (1,)), ((), ())),
        preferred_element_type=jnp.float32)                 # (2D, TM)
    full = jnp.clip(raw + b_ref[...], -10.0, 10.0)

    aux = aux_ref[...]                                      # (8, TM)
    true_rows = aux[0:d, :]                                 # override values
    x0_row = aux[d:d + 1, :]                                # X0[..., -1]
    mask_row = aux[d + 1:d + 2, :]                          # 1.0 on OP nodes

    mean = jnp.where(mask_row > 0.5, true_rows, full[:d, :])
    log_var = full[d:, :]

    # Fused (4D, TM) output slab: [mean; log_var; ones; mean - x0].
    out_ref[0:d, :] = mean
    out_ref[d:2 * d, :] = log_var
    out_ref[2 * d:3 * d, :] = jnp.ones_like(mean)
    out_ref[3 * d:4 * d, :] = mean - x0_row
    if out_ref.shape[0] > 4 * d:  # zero any sublane-padding rows (static)
        out_ref[4 * d:, :] = jnp.zeros_like(out_ref[4 * d:, :])


def fused_init_conv(z2d, wc, bc, aux, *, out_dim):
    m_padded, hidden = z2d.shape
    two_d = wc.shape[0]
    aux_rows = aux.shape[0]
    out_rows = _round_up(4 * out_dim, 8)
    tile_m = _pick_tile_m(m_padded)
    grid = (m_padded // tile_m,)

    kernel = functools.partial(_fused_init_kernel, out_dim=out_dim)

    bytes_accessed = (m_padded * hidden * z2d.dtype.itemsize
                      + two_d * hidden * wc.dtype.itemsize + two_d * 4
                      + aux_rows * m_padded * 4
                      + out_rows * m_padded * 4)
    cost = pl.CostEstimate(flops=2 * m_padded * hidden * two_d,
                           transcendentals=0, bytes_accessed=bytes_accessed)

    return pl.pallas_call(
        kernel,
        out_shape=jax.ShapeDtypeStruct((out_rows, m_padded), jnp.float32),
        grid_spec=pltpu.PrefetchScalarGridSpec(
            num_scalar_prefetch=0,
            grid=grid,
            in_specs=[
                pl.BlockSpec((tile_m, hidden), lambda i: (i, 0)),   # z (natural)
                pl.BlockSpec((two_d, hidden), lambda i: (0, 0)),    # resident W
                pl.BlockSpec((two_d, 1), lambda i: (0, 0)),         # resident b
                pl.BlockSpec((aux_rows, tile_m), lambda i: (0, i)), # aux slab
            ],
            out_specs=pl.BlockSpec((out_rows, tile_m), lambda i: (0, i)),
        ),
        compiler_params=pltpu.CompilerParams(
            dimension_semantics=("parallel",),       # megacore-shard M on v7x
            vmem_limit_bytes=32 * 1024 * 1024,       # safe on v5e/v6e/v7x; tiles stay ~3 MB
        ),
        cost_estimate=cost,
    )(z2d, wc, bc, aux)


# ---------------------------------------------------------------------------
# Wrapper reproducing the num == 0 branch of Out_func_csde.forward
# ---------------------------------------------------------------------------
def out_func_csde_init_step(sde_out, true_u, X0, w_mean, b_mean, w_lv, b_lv,
                            OP_index_list, *, num_node, hidden_dim, output_dim):
    T, B, _ = sde_out.shape
    N, H, D = num_node, hidden_dim, output_dim
    M = B * N
    Mp = _round_up(max(M, 1), 128)

    # z = sde_out.reshape(T,B,N,H,2)[-1, ..., -1]  -> natural (M, H) layout,
    # cast to bf16 (f32 MXU accumulation keeps precision within tolerance).
    z = sde_out.reshape(T, B, N, H, 2)[-1, ..., -1]           # (B, N, H)
    z2d = z.reshape(M, H).astype(jnp.bfloat16)
    z2d = jnp.pad(z2d, ((0, Mp - M), (0, 0)))                 # (Mp, H)

    # Both init convs share the same activation: fuse into one (2D, H) weight.
    # Conv2d(1, D, kernel=(1,H)) weight (D,1,1,H) -> (D, H).
    wc = jnp.concatenate([w_mean.reshape(D, H), w_lv.reshape(D, H)],
                         axis=0).astype(jnp.bfloat16)         # (2D, H)
    bc = jnp.concatenate([b_mean.reshape(D, 1), b_lv.reshape(D, 1)],
                         axis=0).astype(jnp.float32)          # (2D, 1)

    # 8-row aux slab: rows [0:D] = override values (lane-dense, transposed),
    # row D = X0[..., -1], row D+1 = OP-node mask, rest zero.
    op = OP_index_list.astype(jnp.int32)
    true_dT = jnp.transpose(true_u[:, 0].astype(jnp.float32), (2, 0, 1))  # (D,B,|OP|)
    true_rows = jnp.zeros((D, B, N), jnp.float32).at[:, :, op].set(true_dT)
    mask_node = jnp.zeros((N,), jnp.float32).at[op].set(1.0)  # dup/empty safe
    x0_row = X0[..., -1].astype(jnp.float32).reshape(1, M)
    mask_row = jnp.tile(mask_node, B).reshape(1, M)

    aux_rows = _round_up(D + 2, 8)
    parts = [true_rows.reshape(D, M), x0_row, mask_row]
    pad_rows = aux_rows - (D + 2)
    if pad_rows:
        parts.append(jnp.zeros((pad_rows, M), jnp.float32))
    aux = jnp.concatenate(parts, axis=0)                      # (aux_rows, M)
    aux = jnp.pad(aux, ((0, 0), (0, Mp - M)))                 # (aux_rows, Mp)

    out_slab = fused_init_conv(z2d, wc, bc, aux, out_dim=D)   # (4D_pad, Mp)

    # Single transpose of the fused output slab, then cheap slices.
    slab = out_slab[:, :M].T                                  # (M, 4D_pad)
    y_pred_mean = slab[:, 0:D].reshape(B, N, D)[..., None]    # (B, N, D, 1)
    y_pred_log_var = slab[:, D:2 * D].reshape(B, N, D)[..., None]
    dx_dt = slab[:, 2 * D:4 * D].reshape(B, N, 2 * D)         # (B, N, 2D)

    # TODO(synk): subsequent sdeint integration + decoder step_forward calls
    #             and the final PV_index_list gather/permute need the injected
    #             sde_model / decoder modules and are not implementable here.
    return y_pred_mean, y_pred_log_var, dx_dt


# ---------------------------------------------------------------------------
# Pure-JAX reference (matches PyTorch semantics) for a sanity check.
# ---------------------------------------------------------------------------
def _reference(sde_out, true_u, X0, w_mean, b_mean, w_lv, b_lv, OP_index_list,
               *, num_node, hidden_dim, output_dim):
    T, B, _ = sde_out.shape
    N, H, D = num_node, hidden_dim, output_dim
    z = sde_out.reshape(T, B, N, H, 2)[-1, ..., -1]           # (B, N, H)
    mean = jnp.clip(jnp.einsum('bnh,dh->bnd', z, w_mean.reshape(D, H)) + b_mean,
                    -10.0, 10.0)
    lv = jnp.clip(jnp.einsum('bnh,dh->bnd', z, w_lv.reshape(D, H)) + b_lv,
                  -10.0, 10.0)
    mean = mean.at[:, OP_index_list, :].set(true_u[:, 0])
    diff = mean - X0[..., -1][..., None]
    dx = jnp.concatenate([jnp.ones_like(mean), diff], axis=-1)
    return mean[..., None], lv[..., None], dx


if __name__ == "__main__":
    key = jax.random.PRNGKey(0)
    B, N, H, D = 2, 8, 32, 4              # batch, num_node, hidden_dim, output_dim
    T, F_len, hist_len = 5, 3, 6          # sde steps, forecast_len, history length
    OP_index_list = jnp.array([5, 6, 7], dtype=jnp.int32)

    ks = jax.random.split(key, 7)
    sde_out = jax.random.normal(ks[0], (T, B, N * H * 2), dtype=jnp.float32)
    true_u = jax.random.normal(ks[1], (B, F_len, OP_index_list.shape[0], D),
                               dtype=jnp.float32)
    X0 = jax.random.normal(ks[2], (B, N, hist_len), dtype=jnp.float32)
    w_mean = (0.1 * jax.random.normal(ks[3], (D, 1, 1, H))).astype(jnp.float32)
    b_mean = (0.1 * jax.random.normal(ks[4], (D,))).astype(jnp.float32)
    w_lv = (0.1 * jax.random.normal(ks[5], (D, 1, 1, H))).astype(jnp.float32)
    b_lv = (0.1 * jax.random.normal(ks[6], (D,))).astype(jnp.float32)

    y_mean, y_lv, dx_dt = out_func_csde_init_step(
        sde_out, true_u, X0, w_mean, b_mean, w_lv, b_lv, OP_index_list,
        num_node=N, hidden_dim=H, output_dim=D)
    jax.block_until_ready((y_mean, y_lv, dx_dt))

    assert y_mean.shape == (B, N, D, 1)
    assert y_lv.shape == (B, N, D, 1)
    assert dx_dt.shape == (B, N, 2 * D)

    r_mean, r_lv, r_dx = _reference(
        sde_out, true_u, X0, w_mean, b_mean, w_lv, b_lv, OP_index_list,
        num_node=N, hidden_dim=H, output_dim=D)
    assert bool(jnp.allclose(y_mean, r_mean, rtol=1e-2, atol=1e-2))
    assert bool(jnp.allclose(y_lv, r_lv, rtol=1e-2, atol=1e-2))
    assert bool(jnp.allclose(dx_dt, r_dx, rtol=1e-2, atol=1e-2))

    print("KERNEL_OK")
</pallas_src>

<mosaic_0001>
module attributes {stable_mosaic.version = 11 : i64} {
  func.func @_fused_init_kernel(%arg0: i32, %arg1: memref<128x32xbf16, #tpu.memory_space<vmem>>, %arg2: memref<8x32xbf16, #tpu.memory_space<vmem>>, %arg3: memref<8x1xf32, #tpu.memory_space<vmem>>, %arg4: memref<8x128xf32, #tpu.memory_space<vmem>>, %arg5: memref<16x128xf32, #tpu.memory_space<vmem>>) attributes {dimension_semantics = [#tpu.dimension_semantics<parallel>], iteration_bounds = array<i64: 1>, scalar_prefetch = 0 : i64, scratch_operands = 0 : i64, tpu.core_type = #tpu.core_type<tc>, window_params = [{transform_indices = @transform_0, window_bounds = array<i64: 128, 32>}, {pipeline_mode = #tpu.pipeline_mode<synchronous>, transform_indices = @transform_1, window_bounds = array<i64: 8, 32>}, {pipeline_mode = #tpu.pipeline_mode<synchronous>, transform_indices = @transform_2, window_bounds = array<i64: 8, 1>}, {transform_indices = @transform_3, window_bounds = array<i64: 8, 128>}, {transform_indices = @transform_4, window_bounds = array<i64: 16, 128>}]} {
    %c0 = arith.constant 0 : index
    %c0_0 = arith.constant 0 : index
    %0 = vector.load %arg2[%c0, %c0_0] : memref<8x32xbf16, #tpu.memory_space<vmem>>, vector<8x32xbf16>
    %c0_1 = arith.constant 0 : index
    %c0_2 = arith.constant 0 : index
    %1 = vector.load %arg1[%c0_1, %c0_2] : memref<128x32xbf16, #tpu.memory_space<vmem>>, vector<128x32xbf16>
    %cst = arith.constant dense<0.000000e+00> : vector<8x128xf32>
    %2 = tpu.matmul %0, %1, %cst {dimension_numbers = #tpu.dot_dimension_numbers<[1], [1], [0], [0], [0, 0, 1, 0], [], []>} : vector<8x32xbf16>, vector<128x32xbf16>, vector<8x128xf32> -> vector<8x128xf32>
    %c0_3 = arith.constant 0 : index
    %c0_4 = arith.constant 0 : index
    %3 = vector.load %arg3[%c0_3, %c0_4] : memref<8x1xf32, #tpu.memory_space<vmem>>, vector<8x1xf32>
    %4 = vector.broadcast %3 : vector<8x1xf32> to vector<8x128xf32>
    %5 = arith.addf %2, %4 : vector<8x128xf32>
    %cst_5 = arith.constant -1.000000e+01 : f32
    %cst_6 = arith.constant 1.000000e+01 : f32
    %6 = vector.broadcast %cst_5 : f32 to vector<8x128xf32>
    %7 = arith.maximumf %6, %5 : vector<8x128xf32>
    %8 = vector.broadcast %cst_6 : f32 to vector<8x128xf32>
    %9 = arith.minimumf %8, %7 : vector<8x128xf32>
    %c0_7 = arith.constant 0 : index
    %c0_8 = arith.constant 0 : index
    %10 = vector.load %arg4[%c0_7, %c0_8] : memref<8x128xf32, #tpu.memory_space<vmem>>, vector<8x128xf32>
    %11 = vector.extract_strided_slice %10 {offsets = [0, 0], sizes = [4, 128], strides = [1, 1]} : vector<8x128xf32> to vector<4x128xf32>
    %12 = vector.extract_strided_slice %10 {offsets = [4, 0], sizes = [1, 128], strides = [1, 1]} : vector<8x128xf32> to vector<1x128xf32>
    %13 = vector.extract_strided_slice %10 {offsets = [5, 0], sizes = [1, 128], strides = [1, 1]} : vector<8x128xf32> to vector<1x128xf32>
    %cst_9 = arith.constant 5.000000e-01 : f32
    %14 = vector.broadcast %cst_9 : f32 to vector<1x128xf32>
    %15 = arith.cmpf ogt, %13, %14 : vector<1x128xf32>
    %16 = vector.extract_strided_slice %9 {offsets = [0, 0], sizes = [4, 128], strides = [1, 1]} : vector<8x128xf32> to vector<4x128xf32>
    %17 = vector.shape_cast %15 : vector<1x128xi1> to vector<1x128xi1>
    %18 = vector.broadcast %17 : vector<1x128xi1> to vector<4x128xi1>
    %19 = arith.select %18, %11, %16 : vector<4x128xi1>, vector<4x128xf32>
    %20 = vector.extract_strided_slice %9 {offsets = [4, 0], sizes = [4, 128], strides = [1, 1]} : vector<8x128xf32> to vector<4x128xf32>
    %c0_10 = arith.constant 0 : index
    %c0_11 = arith.constant 0 : index
    %21 = vector.load %arg5[%c0_10, %c0_11] : memref<16x128xf32, #tpu.memory_space<vmem>>, vector<4x128xf32>
    tpu.vector_store %arg5[%c0_10, %c0_11], %19 {strides = array<i32>} : memref<16x128xf32, #tpu.memory_space<vmem>>, vector<4x128xf32>,
    %c4 = arith.constant 4 : index
    %c0_12 = arith.constant 0 : index
    %22 = vector.load %arg5[%c4, %c0_12] : memref<16x128xf32, #tpu.memory_space<vmem>>, vector<4x128xf32>
    tpu.vector_store %arg5[%c4, %c0_12], %20 {strides = array<i32>} : memref<16x128xf32, #tpu.memory_space<vmem>>, vector<4x128xf32>,
    %cst_13 = arith.constant 1.000000e+00 : f32
    %23 = vector.broadcast %cst_13 : f32 to vector<4x128xf32>
    %c8 = arith.constant 8 : index
    %c0_14 = arith.constant 0 : index
    %24 = vector.load %arg5[%c8, %c0_14] : memref<16x128xf32, #tpu.memory_space<vmem>>, vector<4x128xf32>
    tpu.vector_store %arg5[%c8, %c0_14], %23 {strides = array<i32>} : memref<16x128xf32, #tpu.memory_space<vmem>>, vector<4x128xf32>,
    %25 = vector.broadcast %12 : vector<1x128xf32> to vector<4x128xf32>
    %26 = arith.subf %19, %25 : vector<4x128xf32>
    %c12 = arith.constant 12 : index
    %c0_15 = arith.constant 0 : index
    %27 = vector.load %arg5[%c12, %c0_15] : memref<16x128xf32, #tpu.memory_space<vmem>>, vector<4x128xf32>
    tpu.vector_store %arg5[%c12, %c0_15], %26 {strides = array<i32>} : memref<16x128xf32, #tpu.memory_space<vmem>>, vector<4x128xf32>,
    return
  }
  func.func @transform_0(%arg0: i32) -> (i32, i32) {
    %c0_i32 = arith.constant 0 : i32
    %c0_i32_0 = arith.constant 0 : i32
    return %arg0, %c0_i32 : i32, i32
  }
  func.func @transform_1(%arg0: i32) -> (i32, i32) {
    %c0_i32 = arith.constant 0 : i32
    %c0_i32_0 = arith.constant 0 : i32
    %c0_i32_1 = arith.constant 0 : i32
    return %c0_i32, %c0_i32_0 : i32, i32
  }
  func.func @transform_2(%arg0: i32) -> (i32, i32) {
    %c0_i32 = arith.constant 0 : i32
    %c0_i32_0 = arith.constant 0 : i32
    %c0_i32_1 = arith.constant 0 : i32
    return %c0_i32, %c0_i32_0 : i32, i32
  }
  func.func @transform_3(%arg0: i32) -> (i32, i32) {
    %c0_i32 = arith.constant 0 : i32
    %c0_i32_0 = arith.constant 0 : i32
    return %c0_i32, %arg0 : i32, i32
  }
  func.func @transform_4(%arg0: i32) -> (i32, i32) {
    %c0_i32 = arith.constant 0 : i32
    %c0_i32_0 = arith.constant 0 : i32
    return %c0_i32, %arg0 : i32, i32
  }
}

</mosaic_0001>

<llo_original>
// kernel: tpu_custom_call.1
$region0: #{tpu_custom_call.1}
  #allocation0 [shape = 'u32[]', space=smem, size = 0x4, offset = 0x4, fixed_abs, tag = 'smem constant byte address 0x4 - core index']
  #allocation1 [shape = 'u32[144,128]{1,0:T(1,128)}', space=vmem, size = 0x12000, scoped, tag = 'internal scratch']
  %s0 = inlined_call_operand.vmem [shape: bf16[128,32], index: 0, kind: input, shape index: {}]
  %s1 = inlined_call_operand.vmem [shape: bf16[8,32], index: 1, kind: input, shape index: {}]
  %s2 = inlined_call_operand.vmem [shape: f32[8,1], index: 2, kind: input, shape index: {}]
  %s3 = inlined_call_operand.vmem [shape: f32[8,128], index: 3, kind: input, shape index: {}]
  %s4 = inlined_call_operand.hbm [shape: f32[16,128], index: 4, kind: output, shape index: {}]
  %s5 = sld [smem:[#allocation0]]
  $region26: #{tpu_custom_call.1} parent=0
    _
  %s7 = ssub.s32 1, %s5
  %s8 = scalar_select 0, %s7, %s5
  $region1: #{tpu_custom_call.1} parent=0
    #allocation2 [shape = 'u8[8192]{0}', space=vmem, size = 0x2000, scoped, tag = 'output window, operand 0, single buffered']
    #allocation3 [shape = 's32[1]{0}', space=sflag, size = 0x4, scoped, tag = 'scoped memory for tpu_custom_call.1']
    %9 = vsyncpa [#allocation3], 0
    // Predicated region
    $region2: #{tpu_custom_call.1} parent=1 // pred_check
      _
    $region3: #{tpu_custom_call.1} parent=1 // pred_check_branch
      %11 = sbr.rel (0) target = $region5
    $region4: #{tpu_custom_call.1} parent=1 // pred_region
      _
    $region5: #{tpu_custom_call.1} parent=1 // pred_fallthru
      _
    // Predicated region
    $region6: #{tpu_custom_call.1} parent=1 // pred_check
      _
    $region7: #{tpu_custom_call.1} parent=1 // pred_check_branch
      %13 = sbr.rel (0) target = $region9
    $region8: #{tpu_custom_call.1} parent=1 // pred_region
      _
    $region9: #{tpu_custom_call.1} parent=1 // pred_fallthru
      _
    // Predicated region
    $region10: #{tpu_custom_call.1} parent=1 // pred_check
      _
    $region11: #{tpu_custom_call.1} parent=1 // pred_check_branch
      %15 = sbr.rel (0) target = $region13
    $region12: #{tpu_custom_call.1} parent=1 // pred_region
      _
    $region13: #{tpu_custom_call.1} parent=1 // pred_fallthru
      _
    // Predicated region
    $region14: #{tpu_custom_call.1} parent=1 // pred_check
      _
    $region15: #{tpu_custom_call.1} parent=1 // pred_check_branch
      %17 = sbr.rel (0) target = $region17
    $region16: #{tpu_custom_call.1} parent=1 // pred_region
      _
    $region17: #{tpu_custom_call.1} parent=1 // pred_fallthru
      _
    %v19 = vld [vmem:[%s1] sm:$0xf]
    %v20 = vld [vmem:[%s0] sm:$0xf]
    %v21 = vld [vmem:[%s0 + $0x4] sm:$0xf]
    %v22 = vld [vmem:[%s0 + $0x8] sm:$0xf]
    %v23 = vld [vmem:[%s0 + $0xc] sm:$0xf]
    %v24 = vld [vmem:[%s0 + $0x10] sm:$0xf]
    %v25 = vld [vmem:[%s0 + $0x14] sm:$0xf]
    %v26 = vld [vmem:[%s0 + $0x18] sm:$0xf]
    %v27 = vld [vmem:[%s0 + $0x1c] sm:$0xf]
    %v28 = vld [vmem:[%s0 + $0x20] sm:$0xf]
    %v29 = vld [vmem:[%s0 + $0x24] sm:$0xf]
    %v30 = vld [vmem:[%s0 + $0x28] sm:$0xf]
    %v31 = vld [vmem:[%s0 + $0x2c] sm:$0xf]
    %v32 = vld [vmem:[%s0 + $0x30] sm:$0xf]
    %v33 = vld [vmem:[%s0 + $0x34] sm:$0xf]
    %v34 = vld [vmem:[%s0 + $0x38] sm:$0xf]
    %v35 = vld [vmem:[%s0 + $0x3c] sm:$0xf]
    %v36 = vld [vmem:[%s2] sm:$0xff]
    %38 = vset.pattern.permute.xlu0 0
    %39 = vperm.xlu0 %38, %v36
    %v40 = vpop.permute.xlu0 %39
    %v58 = vunpack.c.l.b16 %v20
    %v59 = vunpack.c.l.b16 %v21
    %v60 = vunpack.c.l.b16 %v22
    %v61 = vunpack.c.l.b16 %v23
    %v62 = vunpack.c.l.b16 %v24
    %v63 = vunpack.c.l.b16 %v25
    %v64 = vunpack.c.l.b16 %v26
    %v65 = vunpack.c.l.b16 %v27
    %v66 = vunpack.c.l.b16 %v28
    %v67 = vunpack.c.l.b16 %v29
    %v68 = vunpack.c.l.b16 %v30
    %v69 = vunpack.c.l.b16 %v31
    %v70 = vunpack.c.l.b16 %v32
    %v71 = vunpack.c.l.b16 %v33
    %v72 = vunpack.c.l.b16 %v34
    %v73 = vunpack.c.l.b16 %v35
    %v74 = vpack.c.b16 %v59, %v58
    %v75 = vpack.c.b16 %v61, %v60
    %v76 = vpack.c.b16 %v63, %v62
    %v77 = vpack.c.b16 %v65, %v64
    %v78 = vpack.c.b16 %v67, %v66
    %v79 = vpack.c.b16 %v69, %v68
    %v80 = vpack.c.b16 %v71, %v70
    %v81 = vpack.c.b16 %v73, %v72
    %vm82 = vcmask 261120
    %v84 = vsel %vm82, %v19, 0
    %v87 = vsel %vm82, %v74, 0
    %v90 = vsel %vm82, %v75, 0
    %v93 = vsel %vm82, %v76, 0
    %v96 = vsel %vm82, %v77, 0
    %v99 = vsel %vm82, %v78, 0
    %v102 = vsel %vm82, %v79, 0
    %v105 = vsel %vm82, %v80, 0
    %v108 = vsel %vm82, %v81, 0
    %110 = vmatprep.subr.bf16.mxu0 0
    %111 = vmatpush1.bf16.xpose.msra.mxu0 %v108
    %112 = vmatprep.subr.bf16.mxu0 0
    %113 = vmatpush1.bf16.xpose.msra.mxu0 %v105
    %114 = vmatprep.subr.bf16.mxu0 0
    %115 = vmatpush1.bf16.xpose.msra.mxu0 %v102
    %116 = vmatprep.subr.bf16.mxu0 0
    %117 = vmatpush1.bf16.xpose.msra.mxu0 %v99
    %118 = vmatprep.subr.bf16.mxu0 0
    %119 = vmatpush1.bf16.xpose.msra.mxu0 %v96
    %120 = vmatprep.subr.bf16.mxu0 0
    %121 = vmatpush1.bf16.xpose.msra.mxu0 %v93
    %122 = vmatprep.subr.bf16.mxu0 0
    %123 = vmatpush1.bf16.xpose.msra.mxu0 %v90
    %124 = vmatprep.subr.bf16.mxu0 0
    %125 = vmatpush1.bf16.xpose.msra.mxu0 %v87
    %126 = vmatprep.subr.bf16.mxu0 0
    %127 = vmatpush2.bf16.xpose.msra.mxu0 0
    %128 = vmatprep.subr.bf16.mxu0 0
    %129 = vmatpush2.bf16.xpose.msra.mxu0 0
    %130 = vmatprep.subr.bf16.mxu0 0
    %131 = vmatpush2.bf16.xpose.msra.mxu0 0
    %132 = vmatprep.subr.bf16.mxu0 0
    %133 = vmatpush2.bf16.xpose.msra.mxu0 0
    %134 = vmatprep.subr.bf16.mxu0 0
    %135 = vmatpush2.bf16.xpose.msra.mxu0 0
    %136 = vmatprep.subr.bf16.mxu0 0
    %137 = vmatpush2.bf16.xpose.msra.mxu0 0
    %138 = vmatprep.subr.bf16.mxu0 0
    %139 = vmatpush2.bf16.xpose.msra.mxu0 0
    %140 = vmatprep.subr.bf16.mxu0 0
    %141 = vmatpush2.bf16.xpose.msra.mxu0 0
    %142 = vmatprep.mubr.bf16.mxu0 0
    %143 = vmatmul.mubr.bf16.gmra.mxu0 %v84
    %v144 = vpop.f32.mrf.mxu0
    %v145 = vadd.f32 %v40, %v144
    %v146 = vpop.f32.mrf.mxu0
    %v147 = vpop.f32.mrf.mxu0
    %v148 = vpop.f32.mrf.mxu0
    %149 = vdwg.mxu0
    %v150 = vmax.f32 %v145, -10.0
    %v151 = vmin.f32 %v150, 10.0
    %v152 = vld [vmem:[%s3] sm:$0xff]
    %vm153 = vcmp.gt.f32.partialorder %v152, 0.5
    %v154 = vsel %vm153, 1, 0
    %v155 = vlaneseq
    %v156 = vshrl.u32 %v155, 7
    %v157 = vsub.s32 5, %v156
    %v158 = vrot.slane %v154, %v157
    %vm159 = vcmp.eq.s32.totalorder %v158, 1
    %v160 = vsel %vm159, %v152, %v151
    %161 = vst [vmem:[#allocation2] sm:$0xf] %v160
    %162 = vst [vmem:[#allocation2] sm:$0xf0] %v151
    %163 = vst [vmem:[#allocation2 + $0x8] sm:$0xf] 1.0
    %v164 = vlaneseq
    %v165 = vshrl.u32 %v164, 7
    %v166 = vsub.s32 4, %v165
    %v167 = vrot.slane %v152, %v166
    %v168 = vsub.f32 %v160, %v167
    %169 = vst [vmem:[#allocation2 + $0xc] sm:$0xf] %v168
    // Predicated region
    $region18: #{tpu_custom_call.1} parent=1 // pred_check
      _
    $region19: #{tpu_custom_call.1} parent=1 // pred_check_branch
      %171 = sbr.rel (0) target = $region21
    $region20: #{tpu_custom_call.1} parent=1 // pred_region
      %s173 = ssub.s32 256, 256
      %174 = vsyncadd [#allocation3], %s173
      %s175 = sshll.u32 [#allocation2], 4
      %s176 = int_to_ptr.vmem [resolvable:$true] %s175
      %181 = dma.vmem_to_hbm [thread:$0]  %s176, 256, %s4, [#allocation3], 128, 128, 8
    $region21: #{tpu_custom_call.1} parent=1 // pred_fallthru
      _
    // Predicated region
    $region22: #{tpu_custom_call.1} parent=1 // pred_check
      _
    $region23: #{tpu_custom_call.1} parent=1 // pred_check_branch
      %183 = sbr.rel (0) target = $region25
    $region24: #{tpu_custom_call.1} parent=1 // pred_region
      %184 = dma.done [#allocation3], 256
    $region25: #{tpu_custom_call.1} parent=1 // pred_fallthru
      _
    %185 = vsyncpa [#allocation3], 1

</llo_original>
